<compile_context>
chip_gen: v6e
topology: v6e:2x2x1
jax: 0.10.0
libtpu: 0.0.40
codegen_flags: <defaults>
</compile_context>

<pallas_src>
import functools

import jax
import jax.numpy as jnp
import numpy as np
from jax import lax
from jax.experimental import pallas as pl
from jax.experimental.pallas import tpu as pltpu

_COUT = 9        # 4 (cls) + 4 (reg) + 1 (ctn) fused output channels
_COUT_PAD = 16   # per-tap row padding so stacked-matmul output slices stay (8,128)-tile aligned


def _dmy_head_kernel(x_ref, w_ref, m_ref, b_ref, o_ref, *, H, W, compute_dtype):
    """One fused-3x3-conv step over a single (batch, C-chunk) grid point.

    x_ref: (1, TC, HW)          channel-major input chunk (spatial flattened on the lane axis)
    w_ref: (9*_COUT_PAD, TC)    all 9 taps' weights stacked along M (each tap's rows padded 9->16)
    m_ref: (9*_COUT_PAD, HW)    per-tap pad=1 boundary masks (0/1), prebroadcast over the tap rows
    b_ref: (_COUT, 1)           fused bias
    o_ref: (1, _COUT, HW)       resident f32 accumulator (same block across the C axis)
    """
    HW = x_ref.shape[2]

    @pl.when(pl.program_id(1) == 0)
    def _init():
        # Initialize the resident output block with the broadcast bias (added exactly once).
        o_ref[...] = jnp.broadcast_to(
            b_ref[...][None, :, :], (1, _COUT, HW)
        ).astype(o_ref.dtype)

    x = x_ref[0].astype(compute_dtype)                                   # (TC, HW)

    # ONE stacked matmul for all 9 taps of this chunk: (144, TC) @ (TC, HW) -> (144, HW) f32.
    res = jnp.dot(w_ref[...], x, preferred_element_type=jnp.float32)

    # Per tap: roll the small (16, HW) result (W @ roll(x) == roll(W @ x)), apply the
    # precomputed pad=1 boundary mask on the rolled OUTPUT rows, accumulate in f32.
    acc = jnp.zeros((_COUT_PAD, HW), jnp.float32)
    for kh in range(3):
        for kw in range(3):
            t = kh * 3 + kw
            d = (kh - 1) * W + (kw - 1)          # flat read offset of this tap
            shift = (-d) % HW                    # roll so rolled[j] == (W_t @ x)[j + d]
            p = res[t * _COUT_PAD:(t + 1) * _COUT_PAD]                   # (16, HW), vreg-aligned
            if shift:
                p = pltpu.roll(p, shift=shift, axis=1)
            acc = acc + p * m_ref[t * _COUT_PAD:(t + 1) * _COUT_PAD, :]

    o_ref[...] = o_ref[...] + acc[None, :_COUT, :]


def _pick_c_chunk(C, HW, itemsize, vmem_budget_bytes=8 * 1024 * 1024):
    """Largest C chunk whose double-buffered x block stays under a conservative VMEM budget
    (budget chosen with v7x's 64 MiB physical / 32 MiB default scoped VMEM in mind)."""
    if C <= 128 or 2 * C * HW * itemsize <= vmem_budget_bytes:
        return C
    best = None
    tc = 128
    while tc < C:
        if C % tc == 0 and 2 * tc * HW * itemsize <= vmem_budget_bytes:
            best = tc
        tc += 128
    return best if best is not None else C


def dmy_head_forward(x_nchw, w_cls, b_cls, w_reg, b_reg, w_ctn, b_ctn,
                     *, compute_dtype=jnp.bfloat16, c_chunk=None):
    """Forward pass of DMYHead.

    x_nchw: (N, C, H, W); w_*: PyTorch-layout (Cout, Cin, 3, 3); b_*: (Cout,).
    Returns (cls, reg, ctn) in NCHW, matching the PyTorch module.
    """
    N, C, H, W = x_nchw.shape
    HW = H * W

    # Fuse the three heads along the output-channel axis: Cout = 4 + 4 + 1 = 9.
    w_fused = jnp.concatenate([w_cls, w_reg, w_ctn], axis=0)             # (9, C, 3, 3)
    b_fused = jnp.concatenate([b_cls, b_reg, b_ctn], axis=0)             # (9,)

    # (Cout, C, kh, kw) -> per-tap (Cout, C), zero-pad rows 9->16, stack along M -> (144, C).
    w_taps = jnp.transpose(w_fused, (2, 3, 0, 1)).reshape(9, _COUT, C)
    w_taps = jnp.pad(w_taps, ((0, 0), (0, _COUT_PAD - _COUT), (0, 0)))
    w_stack = w_taps.reshape(9 * _COUT_PAD, C).astype(compute_dtype)     # (144, C)

    b_k = b_fused.reshape(_COUT, 1).astype(jnp.float32)

    # Precomputed pad=1 boundary masks (static, host-side): one (HW,) 0/1 mask per tap,
    # prebroadcast to the padded tap-row count -> (144, HW).  Loaded into VMEM once (revisited).
    jj = np.arange(HW)
    hh, ww = jj // W, jj % W
    masks = []
    for kh in range(3):
        for kw in range(3):
            valid = ((hh + kh - 1 >= 0) & (hh + kh - 1 < H) &
                     (ww + kw - 1 >= 0) & (ww + kw - 1 < W)).astype(np.float32)
            masks.append(np.broadcast_to(valid[None, :], (_COUT_PAD, HW)))
    mask_k = jnp.asarray(np.concatenate(masks, axis=0))                  # (144, HW), f32

    # Channel-major with spatial flattened: a free (contiguous) view of NCHW -- no HBM pass.
    x_cm = x_nchw.reshape(N, C, HW)

    itemsize = np.dtype(compute_dtype).itemsize
    tc = c_chunk if c_chunk is not None else _pick_c_chunk(C, HW, itemsize)
    assert C % tc == 0, (C, tc)
    n_cc = C // tc

    kernel = functools.partial(_dmy_head_kernel, H=H, W=W, compute_dtype=compute_dtype)

    out = pl.pallas_call(
        kernel,
        out_shape=jax.ShapeDtypeStruct((N, _COUT, HW), jnp.float32),
        grid_spec=pltpu.PrefetchScalarGridSpec(
            num_scalar_prefetch=0,
            grid=(N, n_cc),                              # reduction (C chunks) last
            in_specs=[
                pl.BlockSpec((1, tc, HW), lambda n, c: (n, c, 0)),
                pl.BlockSpec((9 * _COUT_PAD, tc), lambda n, c: (0, c)),
                pl.BlockSpec((9 * _COUT_PAD, HW), lambda n, c: (0, 0)),   # constant -> revisited
                pl.BlockSpec((_COUT, 1), lambda n, c: (0, 0)),            # constant -> revisited
            ],
            out_specs=pl.BlockSpec((1, _COUT, HW), lambda n, c: (n, 0, 0)),
        ),
        compiler_params=pltpu.CompilerParams(
            dimension_semantics=("parallel", "arbitrary"),
        ),
    )(x_cm, w_stack, mask_k, b_k)

    # (N, 9, H*W) is already channel-major (NCHW); reshape is free.
    out = out.reshape(N, _COUT, H, W).astype(x_nchw.dtype)
    # TODO(synk): for very large H*W on v7x (64 MiB VMEM, 2 TCs), add an H-tile "parallel" grid
    # axis with a +/-1-row halo (circular roll + mask alone is not valid across spatial tiles)
    # so blocks fit VMEM and both TensorCores stay busy when N is small.
    return out[:, 0:4], out[:, 4:8], out[:, 8:9]


def _reference_conv(x_nchw, w, b):
    y = lax.conv_general_dilated(
        x_nchw, w, window_strides=(1, 1), padding=((1, 1), (1, 1)),
        dimension_numbers=("NCHW", "OIHW", "NCHW"),
        precision=lax.Precision.HIGHEST,
    )
    return y + b.reshape(1, -1, 1, 1)


def _run_case(N, C, H, W, seed, *, compute_dtype, c_chunk=None, rtol, atol):
    key = jax.random.PRNGKey(seed)
    keys = jax.random.split(key, 7)
    x = jax.random.normal(keys[0], (N, C, H, W), jnp.float32)

    scale = 0.05
    w_cls = scale * jax.random.normal(keys[1], (4, C, 3, 3), jnp.float32)
    b_cls = scale * jax.random.normal(keys[2], (4,), jnp.float32)
    w_reg = scale * jax.random.normal(keys[3], (4, C, 3, 3), jnp.float32)
    b_reg = scale * jax.random.normal(keys[4], (4,), jnp.float32)
    w_ctn = scale * jax.random.normal(keys[5], (1, C, 3, 3), jnp.float32)
    b_ctn = scale * jax.random.normal(keys[6], (1,), jnp.float32)

    fwd = jax.jit(functools.partial(dmy_head_forward,
                                    compute_dtype=compute_dtype, c_chunk=c_chunk))
    cls_o, reg_o, ctn_o = fwd(x, w_cls, b_cls, w_reg, b_reg, w_ctn, b_ctn)
    jax.block_until_ready((cls_o, reg_o, ctn_o))

    for got, (w_, b_) in zip((cls_o, reg_o, ctn_o),
                             ((w_cls, b_cls), (w_reg, b_reg), (w_ctn, b_ctn))):
        ref = _reference_conv(x, w_, b_)
        np.testing.assert_allclose(np.asarray(got), np.asarray(ref), rtol=rtol, atol=atol)


if __name__ == "__main__":
    # Small shapes consistent with the module (in_channels default 512 shrunk for fast tests).
    # f32 compute path (exact), single C chunk:
    _run_case(N=2, C=32, H=16, W=16, seed=0,
              compute_dtype=jnp.float32, rtol=1e-3, atol=1e-3)
    # bf16 MXU path, forced C-chunked reduction (exercises the @pl.when accumulator path):
    _run_case(N=1, C=256, H=16, W=16, seed=1,
              compute_dtype=jnp.bfloat16, c_chunk=128, rtol=5e-2, atol=5e-2)
    # bf16 MXU path at the module's default channel count, auto-picked (whole-C) chunk:
    _run_case(N=2, C=512, H=16, W=16, seed=2,
              compute_dtype=jnp.bfloat16, rtol=5e-2, atol=5e-2)
    print("KERNEL_OK")
</pallas_src>

<mosaic_0001>
module attributes {stable_mosaic.version = 11 : i64} {
  func.func @_dmy_head_kernel(%arg0: i32, %arg1: i32, %arg2: memref<1x32x256xf32, #tpu.memory_space<vmem>>, %arg3: memref<144x32xf32, #tpu.memory_space<vmem>>, %arg4: memref<144x256xf32, #tpu.memory_space<vmem>>, %arg5: memref<9x1xf32, #tpu.memory_space<vmem>>, %arg6: memref<1x9x256xf32, #tpu.memory_space<vmem>>) attributes {dimension_semantics = [#tpu.dimension_semantics<parallel>, #tpu.dimension_semantics<arbitrary>], iteration_bounds = array<i64: 2, 1>, scalar_prefetch = 0 : i64, scratch_operands = 0 : i64, tpu.core_type = #tpu.core_type<tc>, window_params = [{transform_indices = @transform_0, window_bounds = array<i64: 1, 32, 256>}, {transform_indices = @transform_1, window_bounds = array<i64: 144, 32>}, {pipeline_mode = #tpu.pipeline_mode<synchronous>, transform_indices = @transform_2, window_bounds = array<i64: 144, 256>}, {pipeline_mode = #tpu.pipeline_mode<synchronous>, transform_indices = @transform_3, window_bounds = array<i64: 9, 1>}, {transform_indices = @transform_4, window_bounds = array<i64: 1, 9, 256>}]} {
    %c0_i32 = arith.constant 0 : i32
    %0 = arith.cmpi eq, %arg1, %c0_i32 : i32
    %1 = arith.extui %0 : i1 to i32
    %c0_i32_0 = arith.constant 0 : i32
    %2 = arith.cmpi ne, %1, %c0_i32_0 : i32
    scf.if %2 {
      %c0_22 = arith.constant 0 : index
      %c0_23 = arith.constant 0 : index
      %57 = vector.load %arg5[%c0_22, %c0_23] : memref<9x1xf32, #tpu.memory_space<vmem>>, vector<9x1xf32>
      %58 = vector.shape_cast %57 : vector<9x1xf32> to vector<1x9x1xf32>
      %59 = vector.shape_cast %58 : vector<1x9x1xf32> to vector<1x9x1xf32>
      %60 = vector.broadcast %59 : vector<1x9x1xf32> to vector<1x9x256xf32>
      %c0_24 = arith.constant 0 : index
      %c0_25 = arith.constant 0 : index
      %c0_26 = arith.constant 0 : index
      %61 = vector.load %arg6[%c0_24, %c0_25, %c0_26] : memref<1x9x256xf32, #tpu.memory_space<vmem>>, vector<1x9x256xf32>
      tpu.vector_store %arg6[%c0_24, %c0_25, %c0_26], %60 {strides = array<i32>} : memref<1x9x256xf32, #tpu.memory_space<vmem>>, vector<1x9x256xf32>,
    } else {
    }
    %c0 = arith.constant 0 : index
    %c0_1 = arith.constant 0 : index
    %c0_2 = arith.constant 0 : index
    %3 = vector.load %arg2[%c0, %c0_1, %c0_2] : memref<1x32x256xf32, #tpu.memory_space<vmem>>, vector<1x32x256xf32>
    %4 = vector.shape_cast %3 : vector<1x32x256xf32> to vector<32x256xf32>
    %c0_3 = arith.constant 0 : index
    %c0_4 = arith.constant 0 : index
    %5 = vector.load %arg3[%c0_3, %c0_4] : memref<144x32xf32, #tpu.memory_space<vmem>>, vector<144x32xf32>
    %cst = arith.constant dense<0.000000e+00> : vector<144x256xf32>
    %6 = tpu.matmul %5, %4, %cst {dimension_numbers = #tpu.dot_dimension_numbers<[1], [0], [0], [1], [0, 0, 1, 1], [], []>} : vector<144x32xf32>, vector<32x256xf32>, vector<144x256xf32> -> vector<144x256xf32>
    %cst_5 = arith.constant 0.000000e+00 : f32
    %7 = vector.broadcast %cst_5 : f32 to vector<16x256xf32>
    %8 = vector.extract_strided_slice %6 {offsets = [0, 0], sizes = [16, 256], strides = [1, 1]} : vector<144x256xf32> to vector<16x256xf32>
    %c17_i32 = arith.constant 17 : i32
    %9 = tpu.dynamic_rotate %8 by %c17_i32 dim 1 : vector<16x256xf32>, i32 -> vector<16x256xf32>
    %c0_6 = arith.constant 0 : index
    %c0_7 = arith.constant 0 : index
    %10 = vector.load %arg4[%c0_6, %c0_7] : memref<144x256xf32, #tpu.memory_space<vmem>>, vector<16x256xf32>
    %11 = arith.mulf %9, %10 : vector<16x256xf32>
    %12 = arith.addf %7, %11 : vector<16x256xf32>
    %13 = vector.extract_strided_slice %6 {offsets = [16, 0], sizes = [16, 256], strides = [1, 1]} : vector<144x256xf32> to vector<16x256xf32>
    %c16_i32 = arith.constant 16 : i32
    %14 = tpu.dynamic_rotate %13 by %c16_i32 dim 1 : vector<16x256xf32>, i32 -> vector<16x256xf32>
    %c16 = arith.constant 16 : index
    %c0_8 = arith.constant 0 : index
    %15 = vector.load %arg4[%c16, %c0_8] : memref<144x256xf32, #tpu.memory_space<vmem>>, vector<16x256xf32>
    %16 = arith.mulf %14, %15 : vector<16x256xf32>
    %17 = arith.addf %12, %16 : vector<16x256xf32>
    %18 = vector.extract_strided_slice %6 {offsets = [32, 0], sizes = [16, 256], strides = [1, 1]} : vector<144x256xf32> to vector<16x256xf32>
    %c15_i32 = arith.constant 15 : i32
    %19 = tpu.dynamic_rotate %18 by %c15_i32 dim 1 : vector<16x256xf32>, i32 -> vector<16x256xf32>
    %c32 = arith.constant 32 : index
    %c0_9 = arith.constant 0 : index
    %20 = vector.load %arg4[%c32, %c0_9] : memref<144x256xf32, #tpu.memory_space<vmem>>, vector<16x256xf32>
    %21 = arith.mulf %19, %20 : vector<16x256xf32>
    %22 = arith.addf %17, %21 : vector<16x256xf32>
    %23 = vector.extract_strided_slice %6 {offsets = [48, 0], sizes = [16, 256], strides = [1, 1]} : vector<144x256xf32> to vector<16x256xf32>
    %c1_i32 = arith.constant 1 : i32
    %24 = tpu.dynamic_rotate %23 by %c1_i32 dim 1 : vector<16x256xf32>, i32 -> vector<16x256xf32>
    %c48 = arith.constant 48 : index
    %c0_10 = arith.constant 0 : index
    %25 = vector.load %arg4[%c48, %c0_10] : memref<144x256xf32, #tpu.memory_space<vmem>>, vector<16x256xf32>
    %26 = arith.mulf %24, %25 : vector<16x256xf32>
    %27 = arith.addf %22, %26 : vector<16x256xf32>
    %28 = vector.extract_strided_slice %6 {offsets = [64, 0], sizes = [16, 256], strides = [1, 1]} : vector<144x256xf32> to vector<16x256xf32>
    %c64 = arith.constant 64 : index
    %c0_11 = arith.constant 0 : index
    %29 = vector.load %arg4[%c64, %c0_11] : memref<144x256xf32, #tpu.memory_space<vmem>>, vector<16x256xf32>
    %30 = arith.mulf %28, %29 : vector<16x256xf32>
    %31 = arith.addf %27, %30 : vector<16x256xf32>
    %32 = vector.extract_strided_slice %6 {offsets = [80, 0], sizes = [16, 256], strides = [1, 1]} : vector<144x256xf32> to vector<16x256xf32>
    %c255_i32 = arith.constant 255 : i32
    %33 = tpu.dynamic_rotate %32 by %c255_i32 dim 1 : vector<16x256xf32>, i32 -> vector<16x256xf32>
    %c80 = arith.constant 80 : index
    %c0_12 = arith.constant 0 : index
    %34 = vector.load %arg4[%c80, %c0_12] : memref<144x256xf32, #tpu.memory_space<vmem>>, vector<16x256xf32>
    %35 = arith.mulf %33, %34 : vector<16x256xf32>
    %36 = arith.addf %31, %35 : vector<16x256xf32>
    %37 = vector.extract_strided_slice %6 {offsets = [96, 0], sizes = [16, 256], strides = [1, 1]} : vector<144x256xf32> to vector<16x256xf32>
    %c241_i32 = arith.constant 241 : i32
    %38 = tpu.dynamic_rotate %37 by %c241_i32 dim 1 : vector<16x256xf32>, i32 -> vector<16x256xf32>
    %c96 = arith.constant 96 : index
    %c0_13 = arith.constant 0 : index
    %39 = vector.load %arg4[%c96, %c0_13] : memref<144x256xf32, #tpu.memory_space<vmem>>, vector<16x256xf32>
    %40 = arith.mulf %38, %39 : vector<16x256xf32>
    %41 = arith.addf %36, %40 : vector<16x256xf32>
    %42 = vector.extract_strided_slice %6 {offsets = [112, 0], sizes = [16, 256], strides = [1, 1]} : vector<144x256xf32> to vector<16x256xf32>
    %c240_i32 = arith.constant 240 : i32
    %43 = tpu.dynamic_rotate %42 by %c240_i32 dim 1 : vector<16x256xf32>, i32 -> vector<16x256xf32>
    %c112 = arith.constant 112 : index
    %c0_14 = arith.constant 0 : index
    %44 = vector.load %arg4[%c112, %c0_14] : memref<144x256xf32, #tpu.memory_space<vmem>>, vector<16x256xf32>
    %45 = arith.mulf %43, %44 : vector<16x256xf32>
    %46 = arith.addf %41, %45 : vector<16x256xf32>
    %47 = vector.extract_strided_slice %6 {offsets = [128, 0], sizes = [16, 256], strides = [1, 1]} : vector<144x256xf32> to vector<16x256xf32>
    %c239_i32 = arith.constant 239 : i32
    %48 = tpu.dynamic_rotate %47 by %c239_i32 dim 1 : vector<16x256xf32>, i32 -> vector<16x256xf32>
    %c128 = arith.constant 128 : index
    %c0_15 = arith.constant 0 : index
    %49 = vector.load %arg4[%c128, %c0_15] : memref<144x256xf32, #tpu.memory_space<vmem>>, vector<16x256xf32>
    %50 = arith.mulf %48, %49 : vector<16x256xf32>
    %51 = arith.addf %46, %50 : vector<16x256xf32>
    %c0_16 = arith.constant 0 : index
    %c0_17 = arith.constant 0 : index
    %c0_18 = arith.constant 0 : index
    %52 = vector.load %arg6[%c0_16, %c0_17, %c0_18] : memref<1x9x256xf32, #tpu.memory_space<vmem>>, vector<1x9x256xf32>
    %53 = vector.extract_strided_slice %51 {offsets = [0, 0], sizes = [9, 256], strides = [1, 1]} : vector<16x256xf32> to vector<9x256xf32>
    %54 = vector.shape_cast %53 : vector<9x256xf32> to vector<1x9x256xf32>
    %55 = arith.addf %52, %54 : vector<1x9x256xf32>
    %c0_19 = arith.constant 0 : index
    %c0_20 = arith.constant 0 : index
    %c0_21 = arith.constant 0 : index
    %56 = vector.load %arg6[%c0_19, %c0_20, %c0_21] : memref<1x9x256xf32, #tpu.memory_space<vmem>>, vector<1x9x256xf32>
    tpu.vector_store %arg6[%c0_19, %c0_20, %c0_21], %55 {strides = array<i32>} : memref<1x9x256xf32, #tpu.memory_space<vmem>>, vector<1x9x256xf32>,
    return
  }
  func.func @transform_0(%arg0: i32, %arg1: i32) -> (i32, i32, i32) {
    %c0_i32 = arith.constant 0 : i32
    %c0_i32_0 = arith.constant 0 : i32
    return %arg0, %arg1, %c0_i32 : i32, i32, i32
  }
  func.func @transform_1(%arg0: i32, %arg1: i32) -> (i32, i32) {
    %c0_i32 = arith.constant 0 : i32
    %c0_i32_0 = arith.constant 0 : i32
    return %c0_i32, %arg1 : i32, i32
  }
  func.func @transform_2(%arg0: i32, %arg1: i32) -> (i32, i32) {
    %c0_i32 = arith.constant 0 : i32
    %c0_i32_0 = arith.constant 0 : i32
    %c0_i32_1 = arith.constant 0 : i32
    return %c0_i32, %c0_i32_0 : i32, i32
  }
  func.func @transform_3(%arg0: i32, %arg1: i32) -> (i32, i32) {
    %c0_i32 = arith.constant 0 : i32
    %c0_i32_0 = arith.constant 0 : i32
    %c0_i32_1 = arith.constant 0 : i32
    return %c0_i32, %c0_i32_0 : i32, i32
  }
  func.func @transform_4(%arg0: i32, %arg1: i32) -> (i32, i32, i32) {
    %c0_i32 = arith.constant 0 : i32
    %c0_i32_0 = arith.constant 0 : i32
    %c0_i32_1 = arith.constant 0 : i32
    return %arg0, %c0_i32, %c0_i32_0 : i32, i32, i32
  }
}

</mosaic_0001>

<llo_original>
// kernel: dmy_head_forward.1
$region0: #{dmy_head_forward.1}
  #allocation0 [shape = 'u32[]', space=smem, size = 0x4, offset = 0x4, fixed_abs, tag = 'smem constant byte address 0x4 - core index']
  #allocation1 [shape = 'u32[144,128]{1,0:T(1,128)}', space=vmem, size = 0x12000, scoped, tag = 'internal scratch']
  %s0 = inlined_call_operand.vmem [shape: f32[2,32,256], index: 0, kind: input, shape index: {}]
  %s1 = inlined_call_operand.vmem [shape: f32[144,32], index: 1, kind: input, shape index: {}]
  %s2 = inlined_call_operand.vmem [shape: f32[144,256], index: 2, kind: input, shape index: {}]
  %s3 = inlined_call_operand.vmem [shape: f32[9,1], index: 3, kind: input, shape index: {}]
  %s4 = inlined_call_operand.vmem [shape: f32[2,9,256], index: 4, kind: output, shape index: {}]
  %s5 = sld [smem:[#allocation0]]
  $region53: #{dmy_head_forward.1} parent=0
    _
  %s7 = ssub.s32 1, %s5
  %s8 = scalar_select 0, %s7, %s5
  loop: start=0, step=1, limit=4
  $region2: #{dmy_head_forward.1} parent=0 // loop_pre_header
    _
  $region3: #{dmy_head_forward.1} parent=0 // loop_header
    %s10 = sphi 0, %s14
    %p11 = scmp.ge.s32.totalorder %s10, 4
    %s17 = sphi 0, %s29
    %s18 = sphi 0, %s25
    %s19 = sphi 0, %s17
    %s20 = sphi 0, %s18
    %s21 = sphi 0, %s19
    %s22 = sphi 0, %s20
    %s34 = sphi 0, %s36
    %s37 = sphi 0, %s34
    %s38 = sphi 0, %s37
    %s54 = sphi 0, %s38
    %s60 = sphi 0, %s62
    %s63 = sphi 0, %s60
    %s64 = sphi 0, %s63
    %s80 = sphi 0, %s64
    %s84 = sphi 0, %s84
    %s86 = sphi 0, %s84
    %s87 = sphi 0, %s86
    %s101 = sphi 0, %s87
    %s105 = sphi 0, %s105
    %s107 = sphi 0, %s105
    %s108 = sphi 0, %s107
    %s122 = sphi 0, %s108
    %s128 = sphi 0, %s130
    %s131 = sphi 0, %s128
    %s132 = sphi 0, %s131
    %s148 = sphi 0, %s132
  $region4: #{dmy_head_forward.1} parent=0 // loop_header_branch
    %13 = sbr.rel (%p11) target = $region8
  $region5: #{dmy_head_forward.1} parent=0 // loop_body
    %s15 = ssub.s32 %s10, 1
    %s16 = ssub.s32 %s10, 2
    %s23 = sadd.s32 1, %s18
    %p24 = scmp.ge.s32.totalorder %s23, 1
    %s25 = scalar_select %p24, 0, %s23
    %s26 = sadd.s32 1, %s17
    %s27 = scalar_select %p24, %s26, %s17
    %p28 = scmp.ge.s32.totalorder %s27, 2
    %s29 = scalar_select %p28, 0, %s27
    %s30 = ssub.s32 %s17, %s29
    %s31 = ssub.s32 %s18, %s25
    %s32 = sor.u32 %s30, %s31
    %p33 = scmp.eq.s32.totalorder %s32, 0
    %s35 = sadd.s32 %s34, 1
    %s36 = scalar_select %p33, %s34, %s35
    %p39 = pneg %p33
    %p40 = scmp.eq.s32.totalorder %s10, 1
    %p41 = por %p39, %p40
    %p42 = scmp.ne.s32.totalorder %s34, %s37
    %p43 = scmp.eq.s32.totalorder %s10, 0
    %p44 = por %p42, %p43
    %p45 = scmp.ne.s32.totalorder %s34, %s37
    %p46 = scmp.eq.s32.totalorder %s15, 1
    %p47 = por %p45, %p46
    %p48 = scmp.ne.s32.totalorder %s37, %s38
    %p49 = scmp.eq.s32.totalorder %s15, 0
    %p50 = por %p48, %p49
    %p51 = scmp.ne.s32.totalorder %s37, %s38
    %p52 = scmp.eq.s32.totalorder %s16, 1
    %p53 = por %p51, %p52
    %p55 = scmp.ne.s32.totalorder %s38, %s54
    %p56 = scmp.eq.s32.totalorder %s16, 0
    %p57 = por %p55, %p56
    %s58 = ssub.s32 %s18, %s25
    %p59 = scmp.eq.s32.totalorder %s58, 0
    %s61 = sadd.s32 %s60, 1
    %s62 = scalar_select %p59, %s60, %s61
    %p65 = pneg %p59
    %p66 = scmp.eq.s32.totalorder %s10, 1
    %p67 = por %p65, %p66
    %p68 = scmp.ne.s32.totalorder %s60, %s63
    %p69 = scmp.eq.s32.totalorder %s10, 0
    %p70 = por %p68, %p69
    %p71 = scmp.ne.s32.totalorder %s60, %s63
    %p72 = scmp.eq.s32.totalorder %s15, 1
    %p73 = por %p71, %p72
    %p74 = scmp.ne.s32.totalorder %s63, %s64
    %p75 = scmp.eq.s32.totalorder %s15, 0
    %p76 = por %p74, %p75
    %p77 = scmp.ne.s32.totalorder %s63, %s64
    %p78 = scmp.eq.s32.totalorder %s16, 1
    %p79 = por %p77, %p78
    %p81 = scmp.ne.s32.totalorder %s64, %s80
    %p82 = scmp.eq.s32.totalorder %s16, 0
    %p83 = por %p81, %p82
    %s85 = sadd.s32 %s84, 1
    %p88 = scmp.eq.s32.totalorder %s10, 1
    %p89 = scmp.ne.s32.totalorder %s84, %s86
    %p90 = scmp.eq.s32.totalorder %s10, 0
    %p91 = por %p89, %p90
    %p92 = scmp.ne.s32.totalorder %s84, %s86
    %p93 = scmp.eq.s32.totalorder %s15, 1
    %p94 = por %p92, %p93
    %p95 = scmp.ne.s32.totalorder %s86, %s87
    %p96 = scmp.eq.s32.totalorder %s15, 0
    %p97 = por %p95, %p96
    %p98 = scmp.ne.s32.totalorder %s86, %s87
    %p99 = scmp.eq.s32.totalorder %s16, 1
    %p100 = por %p98, %p99
    %p102 = scmp.ne.s32.totalorder %s87, %s101
    %p103 = scmp.eq.s32.totalorder %s16, 0
    %p104 = por %p102, %p103
    %s106 = sadd.s32 %s105, 1
    %p109 = scmp.eq.s32.totalorder %s10, 1
    %p110 = scmp.ne.s32.totalorder %s105, %s107
    %p111 = scmp.eq.s32.totalorder %s10, 0
    %p112 = por %p110, %p111
    %p113 = scmp.ne.s32.totalorder %s105, %s107
    %p114 = scmp.eq.s32.totalorder %s15, 1
    %p115 = por %p113, %p114
    %p116 = scmp.ne.s32.totalorder %s107, %s108
    %p117 = scmp.eq.s32.totalorder %s15, 0
    %p118 = por %p116, %p117
    %p119 = scmp.ne.s32.totalorder %s107, %s108
    %p120 = scmp.eq.s32.totalorder %s16, 1
    %p121 = por %p119, %p120
    %p123 = scmp.ne.s32.totalorder %s108, %s122
    %p124 = scmp.eq.s32.totalorder %s16, 0
    %p125 = por %p123, %p124
    %s126 = ssub.s32 %s17, %s29
    %p127 = scmp.eq.s32.totalorder %s126, 0
    %s129 = sadd.s32 %s128, 1
    %s130 = scalar_select %p127, %s128, %s129
    %p133 = pneg %p127
    %p134 = scmp.eq.s32.totalorder %s10, 1
    %p135 = por %p133, %p134
    %p136 = scmp.ne.s32.totalorder %s128, %s131
    %p137 = scmp.eq.s32.totalorder %s10, 0
    %p138 = por %p136, %p137
    %p139 = scmp.ne.s32.totalorder %s128, %s131
    %p140 = scmp.eq.s32.totalorder %s15, 1
    %p141 = por %p139, %p140
    %p142 = scmp.ne.s32.totalorder %s131, %s132
    %p143 = scmp.eq.s32.totalorder %s15, 0
    %p144 = por %p142, %p143
    %p145 = scmp.ne.s32.totalorder %s131, %s132
    %p146 = scmp.eq.s32.totalorder %s16, 1
    %p147 = por %p145, %p146
    %p149 = scmp.ne.s32.totalorder %s132, %s148
    %p150 = scmp.eq.s32.totalorder %s16, 0
    %p151 = por %p149, %p150
    %p152 = scmp.le.s32.totalorder 1, %s10
    %p153 = scmp.lt.s32.totalorder %s10, 3
    %p154 = pnand %p152, %p153
    %p155 = pneg %p154
    // Predicated region
    $region9: #{dmy_head_forward.1} parent=5 // pred_check
      _
    $region10: #{dmy_head_forward.1} parent=5 // pred_check_branch
      %157 = sbr.rel (%p154) target = $region12
    $region11: #{dmy_head_forward.1} parent=5 // pred_region
      %s158 = ssub.s32 %s10, 1
      // Predicated region
      $region13: #{dmy_head_forward.1} parent=11 // pred_check
        %p159 = pneg %p76
      $region14: #{dmy_head_forward.1} parent=11 // pred_check_branch
        %161 = sbr.rel (%p159) target = $region16
      $region15: #{dmy_head_forward.1} parent=11 // pred_region
        %p162 = scmp.lt.s32.totalorder %s20, 0
        %s163 = scalar_select %p162, %s20, 0
        %s164 = smul.addr %s163, 8
        %s165 = scalar_lea.vmem %s1, %s164
      $region16: #{dmy_head_forward.1} parent=11 // pred_fallthru
        _
      // Predicated region
      $region17: #{dmy_head_forward.1} parent=11 // pred_check
        %p166 = pneg %p97
      $region18: #{dmy_head_forward.1} parent=11 // pred_check_branch
        %168 = sbr.rel (%p166) target = $region20
      $region19: #{dmy_head_forward.1} parent=11 // pred_region
        _
      $region20: #{dmy_head_forward.1} parent=11 // pred_fallthru
        _
      // Predicated region
      $region21: #{dmy_head_forward.1} parent=11 // pred_check
        %p169 = pneg %p118
      $region22: #{dmy_head_forward.1} parent=11 // pred_check_branch
        %171 = sbr.rel (%p169) target = $region24
      $region23: #{dmy_head_forward.1} parent=11 // pred_region
        _
      $region24: #{dmy_head_forward.1} parent=11 // pred_fallthru
        _
    $region12: #{dmy_head_forward.1} parent=5 // pred_fallthru
      _
    %p172 = scmp.lt.s32.totalorder %s10, 2
    // Predicated region
    $region25: #{dmy_head_forward.1} parent=5 // pred_check
      %p173 = pneg %p172
    $region26: #{dmy_head_forward.1} parent=5 // pred_check_branch
      %175 = sbr.rel (%p173) target = $region28
    $region27: #{dmy_head_forward.1} parent=5 // pred_region
      // Predicated region
      $region29: #{dmy_head_forward.1} parent=27 // pred_check
        %p176 = pneg %p44
      $region30: #{dmy_head_forward.1} parent=27 // pred_check_branch
        %178 = sbr.rel (%p176) target = $region32
      $region31: #{dmy_head_forward.1} parent=27 // pred_region
        %s179 = smul.u32 4, %s18
        %p180 = scmp.lt.s32.totalorder %s17, 1
        %s181 = scalar_select %p180, %s17, 1
        %p182 = scmp.lt.s32.totalorder %s179, 3
        %s183 = scalar_select %p182, %s179, 3
        %s184 = smul.addr %s183, 2
        %s185 = smul.addr %s181, 8
        %s186 = sadd.s32 %s184, %s185
        %s187 = smul.addr %s186, 8
        %s188 = scalar_lea.vmem %s0, %s187
        %s189 = smul.u32 4, %s18
      $region32: #{dmy_head_forward.1} parent=27 // pred_fallthru
        _
    $region28: #{dmy_head_forward.1} parent=5 // pred_fallthru
      _
    %p190 = scmp.le.s32.totalorder 1, %s10
    %p191 = scmp.lt.s32.totalorder %s10, 3
    %p192 = pnand %p190, %p191
    %p193 = pneg %p192
    // Predicated region
    $region33: #{dmy_head_forward.1} parent=5 // pred_check
      _
    $region34: #{dmy_head_forward.1} parent=5 // pred_check_branch
      %195 = sbr.rel (%p192) target = $region36
    $region35: #{dmy_head_forward.1} parent=5 // pred_region
      %s196 = ssub.s32 %s10, 1
      %s197 = smul.u32 4, %s20
      %p198 = scmp.lt.s32.totalorder %s19, 1
      %s199 = scalar_select %p198, %s19, 1
      %p200 = scmp.lt.s32.totalorder %s197, 3
      %s201 = scalar_select %p200, %s197, 3
      %s202 = smul.addr %s201, 2
      %s203 = smul.addr %s199, 8
      %s204 = sadd.s32 %s202, %s203
      %s205 = smul.addr %s204, 8
      %s206 = scalar_lea.vmem %s0, %s205
      %p207 = pneg %p50
      %p208 = pneg %p47
      %p209 = scmp.lt.s32.totalorder %s20, 0
      %s210 = scalar_select %p209, %s20, 0
      %s211 = smul.addr %s210, 8
      %s212 = scalar_lea.vmem %s1, %s211
      %p213 = pneg %p76
      %p214 = pneg %p73
      %p215 = pneg %p97
      %p216 = pneg %p94
      %p217 = pneg %p118
      %p218 = pneg %p115
      %p219 = pneg %p144
      %p220 = pneg %p141
      %p221 = scmp.lt.s32.totalorder %s19, 1
      %s222 = scalar_select %p221, %s19, 1
      %s223 = smul.addr %s222, 4
      %s224 = smul.addr %s223, 8
      %s225 = scalar_lea.vmem %s4, %s224
      %s226 = smul.u32 4, %s20
      %p227 = scmp.lt.s32.totalorder %s19, 1
      %s228 = scalar_select %p227, %s19, 1
      %p229 = scmp.lt.s32.totalorder %s226, 3
      %s230 = scalar_select %p229, %s226, 3
      %s231 = smul.addr %s230, 2
      %s232 = smul.addr %s228, 8
      %s233 = sadd.s32 %s231, %s232
      %s234 = smul.addr %s233, 8
      %s235 = scalar_lea.vmem %s0, %s234
      %s236 = smul.u32 4, %s20
      %p237 = scmp.lt.s32.totalorder %s20, 0
      %s238 = scalar_select %p237, %s20, 0
      %s239 = smul.addr %s238, 8
      %s240 = scalar_lea.vmem %s1, %s239
      %p241 = scmp.lt.s32.totalorder %s19, 1
      %s242 = scalar_select %p241, %s19, 1
      %s243 = smul.addr %s242, 4
      %s244 = smul.addr %s243, 8
      %s245 = scalar_lea.vmem %s4, %s244
      %p246 = scmp.eq.s32.totalorder %s20, 0
      // Predicated region
      $region37: #{dmy_head_forward.1} parent=35 // pred_check
        %p247 = pneg %p246
      $region38: #{dmy_head_forward.1} parent=35 // pred_check_branch
        %249 = sbr.rel (%p247) target = $region40
      $region39: #{dmy_head_forward.1} parent=35 // pred_region
        %v250 = vld [vmem:[%s3] sm:$0xff]
        %v251 = vld [vmem:[%s3 + $0x8] sm:$0x1]
        %253 = vset.pattern.permute.xlu0 0
        %254 = vperm.xlu0 %253, %v250
        %v255 = vpop.permute.xlu0 %254
        %258 = vset.pattern.permute.xlu0 0
        %259 = vperm.xlu0 %258, %v251
        %v260 = vpop.permute.xlu0 %259
        %262 = vst [vmem:[%s245] sm:$0xff] %v255
        %263 = vst [vmem:[%s245 + $0x8] sm:$0xff] %v255
        %264 = vst [vmem:[%s245 + $0x10] sm:$0x1] %v260
        %265 = vst [vmem:[%s245 + $0x18] sm:$0x1] %v260
      $region40: #{dmy_head_forward.1} parent=35 // pred_fallthru
        _
      %v266 = vld [vmem:[%s235] sm:$0xff]
      %v267 = vld [vmem:[%s235 + $0x8] sm:$0xff]
      %v268 = vld [vmem:[%s235 + $0x10] sm:$0xff]
      %v269 = vld [vmem:[%s235 + $0x18] sm:$0xff]
      %v270 = vld [vmem:[%s235 + $0x20] sm:$0xff]
      %v271 = vld [vmem:[%s235 + $0x28] sm:$0xff]
      %v272 = vld [vmem:[%s235 + $0x30] sm:$0xff]
      %v273 = vld [vmem:[%s235 + $0x38] sm:$0xff]
      %v274 = vld [vmem:[%s240] sm:$0xff]
      %v275 = vld [vmem:[%s240 + $0x8] sm:$0xff]
      %v276 = vld [vmem:[%s240 + $0x10] sm:$0xff]
      %v277 = vld [vmem:[%s240 + $0x18] sm:$0xff]
      %v278 = vld [vmem:[%s240 + $0x20] sm:$0xff]
      %v279 = vld [vmem:[%s240 + $0x28] sm:$0xff]
      %v280 = vld [vmem:[%s240 + $0x30] sm:$0xff]
      %v281 = vld [vmem:[%s240 + $0x38] sm:$0xff]
      %v282 = vld [vmem:[%s240 + $0x40] sm:$0xff]
      %v283 = vld [vmem:[%s240 + $0x48] sm:$0xff]
      %v284 = vld [vmem:[%s240 + $0x50] sm:$0xff]
      %v285 = vld [vmem:[%s240 + $0x58] sm:$0xff]
      %v286 = vld [vmem:[%s240 + $0x60] sm:$0xff]
      %v287 = vld [vmem:[%s240 + $0x68] sm:$0xff]
      %v288 = vld [vmem:[%s240 + $0x70] sm:$0xff]
      %v289 = vld [vmem:[%s240 + $0x78] sm:$0xff]
      %v290 = vld [vmem:[%s240 + $0x80] sm:$0xff]
      %v291 = vld [vmem:[%s240 + $0x88] sm:$0xff]
      %vm292 = vcmask 261120
      %v294 = vsel %vm292, %v274, 0
      %v297 = vsel %vm292, %v275, 0
      %v300 = vsel %vm292, %v276, 0
      %v303 = vsel %vm292, %v277, 0
      %v306 = vsel %vm292, %v278, 0
      %v309 = vsel %vm292, %v279, 0
      %v312 = vsel %vm292, %v280, 0
      %v315 = vsel %vm292, %v281, 0
      %v318 = vsel %vm292, %v282, 0
      %v321 = vsel %vm292, %v283, 0
      %v324 = vsel %vm292, %v284, 0
      %v327 = vsel %vm292, %v285, 0
      %v330 = vsel %vm292, %v286, 0
      %v333 = vsel %vm292, %v287, 0
      %v336 = vsel %vm292, %v288, 0
      %v339 = vsel %vm292, %v289, 0
      %v342 = vsel %vm292, %v290, 0
      %v345 = vsel %vm292, %v291, 0
      %347 = vmatprep.subr.mxu0 0.0
      %348 = vmatpush1.msra.mxu0 0.0
      %349 = vmatprep.subr.mxu0 0.0
      %350 = vmatpush1.msra.mxu0 0.0
      %351 = vmatprep.subr.mxu0 0.0
      %352 = vmatpush1.msra.mxu0 0.0
      %353 = vmatprep.subr.mxu0 0.0
      %354 = vmatpush1.msra.mxu0 0.0
      %355 = vmatprep.subr.mxu0 0.0
      %356 = vmatpush1.msra.mxu0 0.0
      %357 = vmatprep.subr.mxu0 0.0
      %358 = vmatpush1.msra.mxu0 0.0
      %359 = vmatprep.subr.mxu0 0.0
      %360 = vmatpush1.msra.mxu0 0.0
      %361 = vmatprep.subr.mxu0 0.0
      %362 = vmatpush1.msra.mxu0 0.0
      %363 = vmatprep.subr.mxu0 0.0
      %364 = vmatpush1.msra.mxu0 0.0
      %365 = vmatprep.subr.mxu0 0.0
      %366 = vmatpush1.msra.mxu0 0.0
      %367 = vmatprep.subr.mxu0 0.0
      %368 = vmatpush1.msra.mxu0 0.0
      %369 = vmatprep.subr.mxu0 0.0
      %370 = vmatpush1.msra.mxu0 0.0
      %371 = vmatprep.subr.mxu0 %v273
      %372 = vmatpush1.msra.mxu0 %v272
      %373 = vmatprep.subr.mxu0 %v271
      %374 = vmatpush1.msra.mxu0 %v270
      %375 = vmatprep.subr.mxu0 %v269
      %376 = vmatpush1.msra.mxu0 %v268
      %377 = vmatprep.subr.mxu0 %v267
      %378 = vmatpush1.msra.mxu0 %v266
      %379 = vmatprep.subr.mxu0 0.0
      %380 = vmatpush2.msra.mxu0 0.0
      %381 = vmatprep.subr.mxu0 0.0
      %382 = vmatpush2.msra.mxu0 0.0
      %383 = vmatprep.subr.mxu0 0.0
      %384 = vmatpush2.msra.mxu0 0.0
      %385 = vmatprep.subr.mxu0 0.0
      %386 = vmatpush2.msra.mxu0 0.0
      %387 = vmatprep.subr.mxu0 0.0
      %388 = vmatpush2.msra.mxu0 0.0
      %389 = vmatprep.subr.mxu0 0.0
      %390 = vmatpush2.msra.mxu0 0.0
      %391 = vmatprep.subr.mxu0 0.0
      %392 = vmatpush2.msra.mxu0 0.0
      %393 = vmatprep.subr.mxu0 0.0
      %394 = vmatpush2.msra.mxu0 0.0
      %395 = vmatprep.subr.mxu0 0.0
      %396 = vmatpush2.msra.mxu0 0.0
      %397 = vmatprep.subr.mxu0 0.0
      %398 = vmatpush2.msra.mxu0 0.0
      %399 = vmatprep.subr.mxu0 0.0
      %400 = vmatpush2.msra.mxu0 0.0
      %401 = vmatprep.subr.mxu0 0.0
      %402 = vmatpush2.msra.mxu0 0.0
      %403 = vmatprep.subr.mxu0 0.0
      %404 = vmatpush2.msra.mxu0 0.0
      %405 = vmatprep.subr.mxu0 0.0
      %406 = vmatpush2.msra.mxu0 0.0
      %407 = vmatprep.subr.mxu0 0.0
      %408 = vmatpush2.msra.mxu0 0.0
      %409 = vmatprep.subr.mxu0 0.0
      %410 = vmatpush2.msra.mxu0 0.0
      %411 = vmatprep.mubr.f32.mxu0 0.0
      %412 = vmatmul.mubr.f32.gmra.mxu0 %v294
      %v413 = vpop.f32.mrf.mxu0
      %v414 = vadd.f32 0.0, %v413
      %v415 = vpop.f32.mrf.mxu0
      %v416 = vadd.f32 0.0, %v415
      %417 = vmatprep.mubr.f32.mxu0 0.0
      %418 = vmatmul.mubr.f32.gmra.mxu0 %v297
      %v419 = vpop.f32.mrf.mxu0
      %v420 = vadd.f32 0.0, %v419
      %v421 = vpop.f32.mrf.mxu0
      %v422 = vadd.f32 0.0, %v421
      %423 = vmatprep.mubr.f32.mxu0 0.0
      %424 = vmatmul.mubr.f32.gmra.mxu0 %v300
      %v425 = vpop.f32.mrf.mxu0
      %v426 = vadd.f32 0.0, %v425
      %v427 = vpop.f32.mrf.mxu0
      %v428 = vadd.f32 0.0, %v427
      %429 = vmatprep.mubr.f32.mxu0 0.0
      %430 = vmatmul.mubr.f32.gmra.mxu0 %v303
      %v431 = vpop.f32.mrf.mxu0
      %v432 = vadd.f32 0.0, %v431
      %v433 = vpop.f32.mrf.mxu0
      %v434 = vadd.f32 0.0, %v433
      %435 = vmatprep.mubr.f32.mxu0 0.0
      %436 = vmatmul.mubr.f32.gmra.mxu0 %v306
      %v437 = vpop.f32.mrf.mxu0
      %v438 = vadd.f32 0.0, %v437
      %v439 = vpop.f32.mrf.mxu0
      %v440 = vadd.f32 0.0, %v439
      %441 = vmatprep.mubr.f32.mxu0 0.0
      %442 = vmatmul.mubr.f32.gmra.mxu0 %v309
      %v443 = vpop.f32.mrf.mxu0
      %v444 = vadd.f32 0.0, %v443
      %v445 = vpop.f32.mrf.mxu0
      %v446 = vadd.f32 0.0, %v445
      %447 = vmatprep.mubr.f32.mxu0 0.0
      %448 = vmatmul.mubr.f32.gmra.mxu0 %v312
      %v449 = vpop.f32.mrf.mxu0
      %v450 = vadd.f32 0.0, %v449
      %v451 = vpop.f32.mrf.mxu0
      %v452 = vadd.f32 0.0, %v451
      %453 = vmatprep.mubr.f32.mxu0 0.0
      %454 = vmatmul.mubr.f32.gmra.mxu0 %v315
      %v455 = vpop.f32.mrf.mxu0
      %v456 = vadd.f32 0.0, %v455
      %v457 = vpop.f32.mrf.mxu0
      %v458 = vadd.f32 0.0, %v457
      %459 = vmatprep.mubr.f32.mxu0 0.0
      %460 = vmatmul.mubr.f32.gmra.mxu0 %v318
      %v461 = vpop.f32.mrf.mxu0
      %v462 = vadd.f32 0.0, %v461
      %v463 = vpop.f32.mrf.mxu0
      %v464 = vadd.f32 0.0, %v463
      %465 = vmatprep.mubr.f32.mxu0 0.0
      %466 = vmatmul.mubr.f32.gmra.mxu0 %v321
      %v467 = vpop.f32.mrf.mxu0
      %v468 = vadd.f32 0.0, %v467
      %v469 = vpop.f32.mrf.mxu0
      %v470 = vadd.f32 0.0, %v469
      %471 = vmatprep.mubr.f32.mxu0 0.0
      %472 = vmatmul.mubr.f32.gmra.mxu0 %v324
      %v473 = vpop.f32.mrf.mxu0
      %v474 = vadd.f32 0.0, %v473
      %v475 = vpop.f32.mrf.mxu0
      %v476 = vadd.f32 0.0, %v475
      %477 = vmatprep.mubr.f32.mxu0 0.0
      %478 = vmatmul.mubr.f32.gmra.mxu0 %v327
      %v479 = vpop.f32.mrf.mxu0
      %v480 = vadd.f32 0.0, %v479
      %v481 = vpop.f32.mrf.mxu0
      %v482 = vadd.f32 0.0, %v481
      %483 = vmatprep.mubr.f32.mxu0 0.0
      %484 = vmatmul.mubr.f32.gmra.mxu0 %v330
      %v485 = vpop.f32.mrf.mxu0
      %v486 = vadd.f32 0.0, %v485
      %v487 = vpop.f32.mrf.mxu0
      %v488 = vadd.f32 0.0, %v487
      %489 = vmatprep.mubr.f32.mxu0 0.0
      %490 = vmatmul.mubr.f32.gmra.mxu0 %v333
      %v491 = vpop.f32.mrf.mxu0
      %v492 = vadd.f32 0.0, %v491
      %v493 = vpop.f32.mrf.mxu0
      %v494 = vadd.f32 0.0, %v493
      %495 = vmatprep.mubr.f32.mxu0 0.0
      %496 = vmatmul.mubr.f32.gmra.mxu0 %v336
      %v497 = vpop.f32.mrf.mxu0
      %v498 = vadd.f32 0.0, %v497
      %v499 = vpop.f32.mrf.mxu0
      %v500 = vadd.f32 0.0, %v499
      %501 = vmatprep.mubr.f32.mxu0 0.0
      %502 = vmatmul.mubr.f32.gmra.mxu0 %v339
      %v503 = vpop.f32.mrf.mxu0
      %v504 = vadd.f32 0.0, %v503
      %v505 = vpop.f32.mrf.mxu0
      %v506 = vadd.f32 0.0, %v505
      %507 = vmatprep.mubr.f32.mxu0 0.0
      %508 = vmatmul.mubr.f32.gmra.mxu0 %v342
      %v509 = vpop.f32.mrf.mxu0
      %v510 = vadd.f32 0.0, %v509
      %v511 = vpop.f32.mrf.mxu0
      %v512 = vadd.f32 0.0, %v511
      %513 = vmatprep.mubr.f32.mxu0 0.0
      %514 = vmatmul.mubr.f32.gmra.mxu0 %v345
      %v515 = vpop.f32.mrf.mxu0
      %v516 = vadd.f32 0.0, %v515
      %v517 = vpop.f32.mrf.mxu0
      %v518 = vadd.f32 0.0, %v517
      %519 = vdwg.mxu0
      %520 = vrot.lane.b32.xlu0 %v414, 17
      %v521 = vpop.permute.xlu0 %520
      %522 = vrot.lane.b32.xlu0 %v420, 17
      %v523 = vpop.permute.xlu0 %522
      %524 = vrot.lane.b32.xlu0 %v416, 17
      %v525 = vpop.permute.xlu0 %524
      %526 = vrot.lane.b32.xlu0 %v422, 17
      %v527 = vpop.permute.xlu0 %526
      %v528 = vlaneseq
      %v529 = vand.u32 %v528, 127
      %vm530 = vcmp.lt.s32.totalorder %v529, 17
      %v531 = vsel %vm530, %v521, %v525
      %v532 = vsel %vm530, %v523, %v527
      %v533 = vsel %vm530, %v525, %v521
      %v534 = vsel %vm530, %v527, %v523
      %v535 = vld [vmem:[%s2] sm:$0xff]
      %v536 = vld [vmem:[%s2 + $0x8] sm:$0xff]
      %v537 = vld [vmem:[%s2 + $0x10] sm:$0xff]
      %v538 = vld [vmem:[%s2 + $0x18] sm:$0xff]
      %v539 = vmul.f32 %v533, %v535
      %v540 = vmul.f32 %v531, %v536
      %v541 = vmul.f32 %v534, %v537
      %v542 = vmul.f32 %v532, %v538
      %v543 = vadd.f32 %v539, 0.0
      %v544 = vadd.f32 %v540, 0.0
      %v545 = vadd.f32 %v541, 0.0
      %v546 = vadd.f32 %v542, 0.0
      %547 = vrot.lane.b32.xlu0 %v426, 16
      %v548 = vpop.permute.xlu0 %547
      %549 = vrot.lane.b32.xlu0 %v432, 16
      %v550 = vpop.permute.xlu0 %549
      %551 = vrot.lane.b32.xlu0 %v428, 16
      %v552 = vpop.permute.xlu0 %551
      %553 = vrot.lane.b32.xlu0 %v434, 16
      %v554 = vpop.permute.xlu0 %553
      %vm555 = vcmp.lt.s32.totalorder %v529, 16
      %v556 = vsel %vm555, %v548, %v552
      %v557 = vsel %vm555, %v550, %v554
      %v558 = vsel %vm555, %v552, %v548
      %v559 = vsel %vm555, %v554, %v550
      %v560 = vld [vmem:[%s2 + $0x20] sm:$0xff]
      %v561 = vld [vmem:[%s2 + $0x28] sm:$0xff]
      %v562 = vld [vmem:[%s2 + $0x30] sm:$0xff]
      %v563 = vld [vmem:[%s2 + $0x38] sm:$0xff]
      %v564 = vmul.f32 %v558, %v560
      %v565 = vmul.f32 %v556, %v561
      %v566 = vmul.f32 %v559, %v562
      %v567 = vmul.f32 %v557, %v563
      %v568 = vadd.f32 %v543, %v564
      %v569 = vadd.f32 %v544, %v565
      %v570 = vadd.f32 %v545, %v566
      %v571 = vadd.f32 %v546, %v567
      %572 = vrot.lane.b32.xlu0 %v438, 15
      %v573 = vpop.permute.xlu0 %572
      %574 = vrot.lane.b32.xlu0 %v444, 15
      %v575 = vpop.permute.xlu0 %574
      %576 = vrot.lane.b32.xlu0 %v440, 15
      %v577 = vpop.permute.xlu0 %576
      %578 = vrot.lane.b32.xlu0 %v446, 15
      %v579 = vpop.permute.xlu0 %578
      %vm580 = vcmp.lt.s32.totalorder %v529, 15
      %v581 = vsel %vm580, %v573, %v577
      %v582 = vsel %vm580, %v575, %v579
      %v583 = vsel %vm580, %v577, %v573
      %v584 = vsel %vm580, %v579, %v575
      %v585 = vld [vmem:[%s2 + $0x40] sm:$0xff]
      %v586 = vld [vmem:[%s2 + $0x48] sm:$0xff]
      %v587 = vld [vmem:[%s2 + $0x50] sm:$0xff]
      %v588 = vld [vmem:[%s2 + $0x58] sm:$0xff]
      %v589 = vmul.f32 %v583, %v585
      %v590 = vmul.f32 %v581, %v586
      %v591 = vmul.f32 %v584, %v587
      %v592 = vmul.f32 %v582, %v588
      %v593 = vadd.f32 %v568, %v589
      %v594 = vadd.f32 %v569, %v590
      %v595 = vadd.f32 %v570, %v591
      %v596 = vadd.f32 %v571, %v592
      %597 = vrot.lane.b32.xlu0 %v450, 1
      %v598 = vpop.permute.xlu0 %597
      %599 = vrot.lane.b32.xlu0 %v456, 1
      %v600 = vpop.permute.xlu0 %599
      %601 = vrot.lane.b32.xlu0 %v452, 1
      %v602 = vpop.permute.xlu0 %601
      %603 = vrot.lane.b32.xlu0 %v458, 1
      %v604 = vpop.permute.xlu0 %603
      %vm605 = vcmp.lt.s32.totalorder %v529, 1
      %v606 = vsel %vm605, %v598, %v602
      %v607 = vsel %vm605, %v600, %v604
      %v608 = vsel %vm605, %v602, %v598
      %v609 = vsel %vm605, %v604, %v600
      %v610 = vld [vmem:[%s2 + $0x60] sm:$0xff]
      %v611 = vld [vmem:[%s2 + $0x68] sm:$0xff]
      %v612 = vld [vmem:[%s2 + $0x70] sm:$0xff]
      %v613 = vld [vmem:[%s2 + $0x78] sm:$0xff]
      %v614 = vmul.f32 %v608, %v610
      %v615 = vmul.f32 %v606, %v611
      %v616 = vmul.f32 %v609, %v612
      %v617 = vmul.f32 %v607, %v613
      %v618 = vadd.f32 %v593, %v614
      %v619 = vadd.f32 %v594, %v615
      %v620 = vadd.f32 %v595, %v616
      %v621 = vadd.f32 %v596, %v617
      %v622 = vld [vmem:[%s2 + $0x80] sm:$0xff]
      %v623 = vld [vmem:[%s2 + $0x88] sm:$0xff]
      %v624 = vld [vmem:[%s2 + $0x90] sm:$0xff]
      %v625 = vld [vmem:[%s2 + $0x98] sm:$0xff]
      %v626 = vmul.f32 %v462, %v622
      %v627 = vmul.f32 %v464, %v623
      %v628 = vmul.f32 %v468, %v624
      %v629 = vmul.f32 %v470, %v625
      %v630 = vadd.f32 %v618, %v626
      %v631 = vadd.f32 %v619, %v627
      %v632 = vadd.f32 %v620, %v628
      %v633 = vadd.f32 %v621, %v629
      %634 = vrot.lane.b32.xlu0 %v474, 127
      %v635 = vpop.permute.xlu0 %634
      %636 = vrot.lane.b32.xlu0 %v480, 127
      %v637 = vpop.permute.xlu0 %636
      %638 = vrot.lane.b32.xlu0 %v476, 127
      %v639 = vpop.permute.xlu0 %638
      %640 = vrot.lane.b32.xlu0 %v482, 127
      %v641 = vpop.permute.xlu0 %640
      %vm642 = vcmp.lt.s32.totalorder %v529, 127
      %v643 = vsel %vm642, %v635, %v639
      %v644 = vsel %vm642, %v637, %v641
      %v645 = vsel %vm642, %v639, %v635
      %v646 = vsel %vm642, %v641, %v637
      %v647 = vld [vmem:[%s2 + $0xa0] sm:$0xff]
      %v648 = vld [vmem:[%s2 + $0xa8] sm:$0xff]
      %v649 = vld [vmem:[%s2 + $0xb0] sm:$0xff]
      %v650 = vld [vmem:[%s2 + $0xb8] sm:$0xff]
      %v651 = vmul.f32 %v643, %v647
      %v652 = vmul.f32 %v645, %v648
      %v653 = vmul.f32 %v644, %v649
      %v654 = vmul.f32 %v646, %v650
      %v655 = vadd.f32 %v630, %v651
      %v656 = vadd.f32 %v631, %v652
      %v657 = vadd.f32 %v632, %v653
      %v658 = vadd.f32 %v633, %v654
      %659 = vrot.lane.b32.xlu0 %v486, 113
      %v660 = vpop.permute.xlu0 %659
      %661 = vrot.lane.b32.xlu0 %v492, 113
      %v662 = vpop.permute.xlu0 %661
      %663 = vrot.lane.b32.xlu0 %v488, 113
      %v664 = vpop.permute.xlu0 %663
      %665 = vrot.lane.b32.xlu0 %v494, 113
      %v666 = vpop.permute.xlu0 %665
      %vm667 = vcmp.lt.s32.totalorder %v529, 113
      %v668 = vsel %vm667, %v660, %v664
      %v669 = vsel %vm667, %v662, %v666
      %v670 = vsel %vm667, %v664, %v660
      %v671 = vsel %vm667, %v666, %v662
      %v672 = vld [vmem:[%s2 + $0xc0] sm:$0xff]
      %v673 = vld [vmem:[%s2 + $0xc8] sm:$0xff]
      %v674 = vld [vmem:[%s2 + $0xd0] sm:$0xff]
      %v675 = vld [vmem:[%s2 + $0xd8] sm:$0xff]
      %v676 = vmul.f32 %v668, %v672
      %v677 = vmul.f32 %v670, %v673
      %v678 = vmul.f32 %v669, %v674
      %v679 = vmul.f32 %v671, %v675
      %v680 = vadd.f32 %v655, %v676
      %v681 = vadd.f32 %v656, %v677
      %v682 = vadd.f32 %v657, %v678
      %v683 = vadd.f32 %v658, %v679
      %684 = vrot.lane.b32.xlu0 %v498, 112
      %v685 = vpop.permute.xlu0 %684
      %686 = vrot.lane.b32.xlu0 %v504, 112
      %v687 = vpop.permute.xlu0 %686
      %688 = vrot.lane.b32.xlu0 %v500, 112
      %v689 = vpop.permute.xlu0 %688
      %690 = vrot.lane.b32.xlu0 %v506, 112
      %v691 = vpop.permute.xlu0 %690
      %vm692 = vcmp.lt.s32.totalorder %v529, 112
      %v693 = vsel %vm692, %v685, %v689
      %v694 = vsel %vm692, %v687, %v691
      %v695 = vsel %vm692, %v689, %v685
      %v696 = vsel %vm692, %v691, %v687
      %v697 = vld [vmem:[%s2 + $0xe0] sm:$0xff]
      %v698 = vld [vmem:[%s2 + $0xe8] sm:$0xff]
      %v699 = vld [vmem:[%s2 + $0xf0] sm:$0xff]
      %v700 = vld [vmem:[%s2 + $0xf8] sm:$0xff]
      %v701 = vmul.f32 %v693, %v697
      %v702 = vmul.f32 %v695, %v698
      %v703 = vmul.f32 %v694, %v699
      %v704 = vmul.f32 %v696, %v700
      %v705 = vadd.f32 %v680, %v701
      %v706 = vadd.f32 %v681, %v702
      %v707 = vadd.f32 %v682, %v703
      %v708 = vadd.f32 %v683, %v704
      %709 = vrot.lane.b32.xlu0 %v510, 111
      %v710 = vpop.permute.xlu0 %709
      %711 = vrot.lane.b32.xlu0 %v516, 111
      %v712 = vpop.permute.xlu0 %711
      %713 = vrot.lane.b32.xlu0 %v512, 111
      %v714 = vpop.permute.xlu0 %713
      %715 = vrot.lane.b32.xlu0 %v518, 111
      %v716 = vpop.permute.xlu0 %715
      %vm717 = vcmp.lt.s32.totalorder %v529, 111
      %v718 = vsel %vm717, %v710, %v714
      %v719 = vsel %vm717, %v712, %v716
      %v720 = vsel %vm717, %v714, %v710
      %v721 = vsel %vm717, %v716, %v712
      %v722 = vld [vmem:[%s2 + $0x100] sm:$0xff]
      %v723 = vld [vmem:[%s2 + $0x108] sm:$0xff]
      %v724 = vld [vmem:[%s2 + $0x110] sm:$0xff]
      %v725 = vld [vmem:[%s2 + $0x118] sm:$0xff]
      %v726 = vmul.f32 %v718, %v722
      %v727 = vmul.f32 %v720, %v723
      %v728 = vmul.f32 %v719, %v724
      %v729 = vmul.f32 %v721, %v725
      %v730 = vadd.f32 %v705, %v726
      %v731 = vadd.f32 %v706, %v727
      %v732 = vadd.f32 %v707, %v728
      %v733 = vadd.f32 %v708, %v729
      %v734 = vld [vmem:[%s245] sm:$0xff]
      %v735 = vld [vmem:[%s245 + $0x8] sm:$0xff]
      %v736 = vld [vmem:[%s245 + $0x10] sm:$0x1]
      %v737 = vld [vmem:[%s245 + $0x18] sm:$0x1]
      %v738 = vadd.f32 %v734, %v730
      %v739 = vadd.f32 %v735, %v731
      %v740 = vadd.f32 %v736, %v732
      %v741 = vadd.f32 %v737, %v733
      %742 = vst [vmem:[%s245] sm:$0xff] %v738
      %743 = vst [vmem:[%s245 + $0x8] sm:$0xff] %v739
      %744 = vst [vmem:[%s245 + $0x10] sm:$0x1] %v740
      %745 = vst [vmem:[%s245 + $0x18] sm:$0x1] %v741
      %p746 = scmp.lt.s32.totalorder %s19, 1
      %s747 = scalar_select %p746, %s19, 1
      %s748 = smul.addr %s747, 4
      %s749 = smul.addr %s748, 8
      %s750 = scalar_lea.vmem %s4, %s749
      // Predicated region
      $region41: #{dmy_head_forward.1} parent=35 // pred_check
        %p751 = pneg %p141
      $region42: #{dmy_head_forward.1} parent=35 // pred_check_branch
        %753 = sbr.rel (%p751) target = $region44
      $region43: #{dmy_head_forward.1} parent=35 // pred_region
        _
      $region44: #{dmy_head_forward.1} parent=35 // pred_fallthru
        _
    $region36: #{dmy_head_forward.1} parent=5 // pred_fallthru
      _
    %p754 = scmp.le.s32.totalorder 2, %s10
    // Predicated region
    $region45: #{dmy_head_forward.1} parent=5 // pred_check
      %p755 = pneg %p754
    $region46: #{dmy_head_forward.1} parent=5 // pred_check_branch
      %757 = sbr.rel (%p755) target = $region48
    $region47: #{dmy_head_forward.1} parent=5 // pred_region
      %s758 = ssub.s32 %s10, 2
      // Predicated region
      $region49: #{dmy_head_forward.1} parent=47 // pred_check
        %p759 = pneg %p147
      $region50: #{dmy_head_forward.1} parent=47 // pred_check_branch
        %761 = sbr.rel (%p759) target = $region52
      $region51: #{dmy_head_forward.1} parent=47 // pred_region
        %p762 = scmp.lt.s32.totalorder %s21, 1
        %s763 = scalar_select %p762, %s21, 1
        %s764 = smul.addr %s763, 4
        %s765 = smul.addr %s764, 8
        %s766 = scalar_lea.vmem %s4, %s765
      $region52: #{dmy_head_forward.1} parent=47 // pred_fallthru
        _
    $region48: #{dmy_head_forward.1} parent=5 // pred_fallthru
      _
  $region6: #{dmy_head_forward.1} parent=0 // loop_footer
    %s14 = sadd.s32 1, %s10
  $region7: #{dmy_head_forward.1} parent=0 // loop_footer_branch
    %9 = sbr.rel target = $region3
  $region8: #{dmy_head_forward.1} parent=0 // loop_exit
    _

</llo_original>
